<compile_context>
chip_gen: v5e
topology: v5e:2x2
jax: 0.10.0
libtpu: 0.0.40
codegen_flags: <defaults>
</compile_context>

<pallas_src>
import functools

import jax
import jax.numpy as jnp
from jax.experimental import pallas as pl
from jax.experimental.pallas import tpu as pltpu


def _attention_kernel(idx_ref, q_ref, ctx_ref, bias_ref, wk_ref, wv_ref, o_ref,
                      *, scale):
    """One batch element per grid step.

    Block views:
      q_ref    : (1, H, N, hd)  Q already projected & head-split in the wrapper
      ctx_ref  : (1, M, C)      context tokens
      bias_ref : (1, 1, M)      additive mask bias (0 keep / -1e30 drop), f32
      wk_ref   : (1, H, C, hd)  condition-selected, pre-arranged K weights
      wv_ref   : (1, H, C, hd)  condition-selected, pre-arranged V weights
      o_ref    : (1, H, N, hd)  f32 attention output (O projection in wrapper)
    """
    q = q_ref[0]                      # (H, N, hd)
    ctx = ctx_ref[0]                  # (M, C)
    bias = bias_ref[...]              # (1, 1, M) f32 -> broadcasts over (H, N, M)
    wk = wk_ref[0]                    # (H, C, hd)
    wv = wv_ref[0]                    # (H, C, hd)

    h = wk.shape[0]
    m, c = ctx.shape
    dots_dtype = q.dtype

    # Condition-dependent K/V projections, batched over heads.  No transposes:
    # weights were pre-arranged in the wrapper.  Total MXU work is identical to
    # a single (M,C)x(C,dim) matmul since H*hd == dim.
    ctx_b = jnp.broadcast_to(ctx, (h, m, c))
    k = jnp.einsum('hmc,hcd->hmd', ctx_b, wk,
                   preferred_element_type=jnp.float32).astype(dots_dtype)
    v = jnp.einsum('hmc,hcd->hmd', ctx_b, wv,
                   preferred_element_type=jnp.float32).astype(dots_dtype)

    # Scores for all heads at once; mask applied as an additive bias.
    s = jnp.einsum('hnd,hmd->hnm', q, k,
                   preferred_element_type=jnp.float32) * scale
    s = s + bias                                          # (H,N,M) + (1,1,M)

    # Numerically stable softmax; normalization deferred until after the PV
    # matmul so the divide becomes one cheap EUP reciprocal on (H,N,1).
    s = s - jnp.max(s, axis=-1, keepdims=True)
    p = jnp.exp(s)
    denom = jnp.sum(p, axis=-1, keepdims=True)

    o = jnp.einsum('hnm,hmd->hnd', p.astype(dots_dtype), v,
                   preferred_element_type=jnp.float32)
    o = o * pl.reciprocal(denom, approx=True)
    o_ref[0] = o.astype(o_ref.dtype)


def attention(x, context, context_mask, context_idx, wq, wk, wv, wo, num_heads,
              compute_dtype=None):
    """Forward pass of the PyTorch Attention module (nn.Linear layout: (out, in))."""
    B, N, dim = x.shape
    _, M, cdim = context.shape
    nc = wk.shape[0]
    assert dim % num_heads == 0
    hd = dim // num_heads
    scale = hd ** (-0.5)
    if compute_dtype is None:
        compute_dtype = x.dtype

    # ---- hoisted, condition-independent work (plain XLA, done once) ---------
    # Q projection as one big matmul, then 'b n (h d) -> b h n d'.
    q = jnp.einsum('bni,oi->bno', x, wq)
    q4 = q.reshape(B, N, num_heads, hd).transpose(0, 2, 1, 3)

    # Pre-arrange K/V weights: (nc, dim, cdim) -> (nc, H, cdim, hd) so the kernel
    # contracts directly (no in-kernel `.T`).
    wkh = wk.reshape(nc, num_heads, hd, cdim).transpose(0, 1, 3, 2)
    wvh = wv.reshape(nc, num_heads, hd, cdim).transpose(0, 1, 3, 2)

    # Additive mask bias: 0 where kept, -1e30 where masked.
    bias = jnp.where(context_mask > 0, 0.0, -1e30).astype(jnp.float32)
    bias = bias.reshape(B, 1, M)

    # Group batches by condition index so consecutive grid steps request the
    # same Wk/Wv block (Pallas skips the HBM->VMEM DMA on repeated block index).
    order = jnp.argsort(context_idx)
    inv_order = jnp.argsort(order)
    idx_s = context_idx[order].astype(jnp.int32)
    q4_s = q4[order].astype(compute_dtype)
    ctx_s = context[order].astype(compute_dtype)
    bias_s = bias[order]
    wkh_c = wkh.astype(compute_dtype)
    wvh_c = wvh.astype(compute_dtype)

    # Explicit scoped-VMEM budget (double-buffered operands + headroom),
    # clamped to 64 MiB so it stays valid on v7x.
    isz = jnp.dtype(compute_dtype).itemsize
    blk_bytes = (num_heads * N * hd * isz                 # q block
                 + M * cdim * isz                         # ctx block
                 + M * 4                                  # bias block
                 + 2 * num_heads * cdim * hd * isz        # Wk + Wv blocks
                 + num_heads * N * hd * 4)                # out block (f32)
    vmem_limit = int(min(64 * 1024 * 1024, max(32 * 1024 * 1024, 3 * blk_bytes)))

    kern = functools.partial(_attention_kernel, scale=scale)
    out4_s = pl.pallas_call(
        kern,
        out_shape=jax.ShapeDtypeStruct((B, num_heads, N, hd), jnp.float32),
        grid_spec=pltpu.PrefetchScalarGridSpec(
            num_scalar_prefetch=1,
            grid=(B,),
            in_specs=[
                pl.BlockSpec((1, num_heads, N, hd),
                             lambda b, idx: (b, 0, 0, 0)),                 # Q
                pl.BlockSpec((1, M, cdim),
                             lambda b, idx: (b, 0, 0)),                    # context
                pl.BlockSpec((1, 1, M),
                             lambda b, idx: (b, 0, 0)),                    # mask bias
                pl.BlockSpec((1, num_heads, cdim, hd),
                             lambda b, idx: (idx[b], 0, 0, 0)),            # Wk[cond]
                pl.BlockSpec((1, num_heads, cdim, hd),
                             lambda b, idx: (idx[b], 0, 0, 0)),            # Wv[cond]
            ],
            out_specs=pl.BlockSpec((1, num_heads, N, hd),
                                   lambda b, idx: (b, 0, 0, 0)),
        ),
        compiler_params=pltpu.CompilerParams(
            dimension_semantics=("parallel",),   # no carried state across batch
            vmem_limit_bytes=vmem_limit,
        ),
    )(idx_s, q4_s, ctx_s, bias_s, wkh_c, wvh_c)

    # Un-sort, 'b h n d -> b n (h d)', then hoisted output projection.
    out4 = out4_s[inv_order]
    out = out4.transpose(0, 2, 1, 3).reshape(B, N, dim)
    return jnp.einsum('bni,oi->bno', out, wo)


def attention_reference(x, context, context_mask, context_idx, wq, wk, wv, wo,
                        num_heads):
    """Pure-JAX reference mirroring the PyTorch module."""
    B, N, dim = x.shape
    hd = dim // num_heads
    q = x @ wq.T
    k = jnp.einsum('bmc,bdc->bmd', context, wk[context_idx])
    v = jnp.einsum('bmc,bdc->bmd', context, wv[context_idx])
    q = q.reshape(B, N, num_heads, hd).transpose(0, 2, 1, 3)
    k = k.reshape(B, -1, num_heads, hd).transpose(0, 2, 1, 3)
    v = v.reshape(B, -1, num_heads, hd).transpose(0, 2, 1, 3)
    s = jnp.einsum('bhid,bhjd->bhij', q, k) * (hd ** (-0.5))
    s = jnp.where(context_mask[:, None, None, :] > 0, s,
                  -jnp.finfo(jnp.float32).max)
    p = jax.nn.softmax(s, axis=-1)
    o = jnp.einsum('bhij,bhjd->bhid', p, v)
    o = o.transpose(0, 2, 1, 3).reshape(B, N, dim)
    return o @ wo.T


if __name__ == "__main__":
    # Small shapes consistent with the module.
    B, N, M = 2, 8, 8
    dim, context_dim = 32, 16
    num_heads, num_conditions = 4, 2

    key = jax.random.PRNGKey(0)
    k1, k2, k3, k4, k5, k6 = jax.random.split(key, 6)

    x = jax.random.normal(k1, (B, N, dim), dtype=jnp.float32)
    context = jax.random.normal(k2, (B, M, context_dim), dtype=jnp.float32)
    # mask: keep everything in batch 0, drop last 3 context tokens of batch 1
    context_mask = jnp.array([[1] * M, [1] * (M - 3) + [0] * 3], dtype=jnp.int32)
    # deliberately unsorted so the idx-grouping path is exercised
    context_idx = jnp.array([1, 0], dtype=jnp.int32)

    # nn.Linear weight layout: (out, in)
    wq = jax.random.normal(k3, (dim, dim), dtype=jnp.float32) * 0.05
    wk = jax.random.normal(k4, (num_conditions, dim, context_dim),
                           dtype=jnp.float32) * 0.05
    wv = jax.random.normal(k5, (num_conditions, dim, context_dim),
                           dtype=jnp.float32) * 0.05
    wo = jax.random.normal(k6, (dim, dim), dtype=jnp.float32) * 0.05

    ref = attention_reference(x, context, context_mask, context_idx,
                              wq, wk, wv, wo, num_heads)

    # f32 compute path (tight-ish check; approx reciprocal in the softmax).
    out_f32 = attention(x, context, context_mask, context_idx,
                        wq, wk, wv, wo, num_heads,
                        compute_dtype=jnp.float32)
    out_f32 = jax.block_until_ready(out_f32)
    assert out_f32.shape == (B, N, dim)
    assert jnp.allclose(out_f32, ref, atol=5e-3, rtol=5e-3), "f32 mismatch vs reference"

    # bf16 compute path (halves DMA bytes / doubles MXU throughput on v6e/v7x).
    out_bf16 = attention(x, context, context_mask, context_idx,
                         wq, wk, wv, wo, num_heads,
                         compute_dtype=jnp.bfloat16)
    out_bf16 = jax.block_until_ready(out_bf16)
    assert jnp.allclose(out_bf16, ref, atol=5e-2, rtol=5e-2), "bf16 mismatch vs reference"

    print("KERNEL_OK")
</pallas_src>

<mosaic_0001>
module attributes {stable_mosaic.version = 11 : i64} {
  func.func @_attention_kernel(%arg0: i32, %arg1: memref<2xi32, #tpu.memory_space<smem>>, %arg2: memref<1x4x8x8xf32, #tpu.memory_space<vmem>>, %arg3: memref<1x8x16xf32, #tpu.memory_space<vmem>>, %arg4: memref<1x1x8xf32, #tpu.memory_space<vmem>>, %arg5: memref<1x4x16x8xf32, #tpu.memory_space<vmem>>, %arg6: memref<1x4x16x8xf32, #tpu.memory_space<vmem>>, %arg7: memref<1x4x8x8xf32, #tpu.memory_space<vmem>>) attributes {dimension_semantics = [#tpu.dimension_semantics<parallel>], iteration_bounds = array<i64: 2>, scalar_prefetch = 1 : i64, scratch_operands = 0 : i64, tpu.core_type = #tpu.core_type<tc>, window_params = [{transform_indices = @transform_0, window_bounds = array<i64: 1, 4, 8, 8>}, {transform_indices = @transform_1, window_bounds = array<i64: 1, 8, 16>}, {transform_indices = @transform_2, window_bounds = array<i64: 1, 1, 8>}, {transform_indices = @transform_3, window_bounds = array<i64: 1, 4, 16, 8>}, {transform_indices = @transform_4, window_bounds = array<i64: 1, 4, 16, 8>}, {transform_indices = @transform_5, window_bounds = array<i64: 1, 4, 8, 8>}]} {
    %c0 = arith.constant 0 : index
    %c0_0 = arith.constant 0 : index
    %c0_1 = arith.constant 0 : index
    %c0_2 = arith.constant 0 : index
    %0 = vector.load %arg2[%c0, %c0_0, %c0_1, %c0_2] : memref<1x4x8x8xf32, #tpu.memory_space<vmem>>, vector<1x4x8x8xf32>
    %1 = vector.shape_cast %0 : vector<1x4x8x8xf32> to vector<4x8x8xf32>
    %c0_3 = arith.constant 0 : index
    %c0_4 = arith.constant 0 : index
    %c0_5 = arith.constant 0 : index
    %2 = vector.load %arg3[%c0_3, %c0_4, %c0_5] : memref<1x8x16xf32, #tpu.memory_space<vmem>>, vector<1x8x16xf32>
    %3 = vector.shape_cast %2 : vector<1x8x16xf32> to vector<8x16xf32>
    %c0_6 = arith.constant 0 : index
    %c0_7 = arith.constant 0 : index
    %c0_8 = arith.constant 0 : index
    %4 = vector.load %arg4[%c0_6, %c0_7, %c0_8] : memref<1x1x8xf32, #tpu.memory_space<vmem>>, vector<1x1x8xf32>
    %c0_9 = arith.constant 0 : index
    %c0_10 = arith.constant 0 : index
    %c0_11 = arith.constant 0 : index
    %c0_12 = arith.constant 0 : index
    %5 = vector.load %arg5[%c0_9, %c0_10, %c0_11, %c0_12] : memref<1x4x16x8xf32, #tpu.memory_space<vmem>>, vector<1x4x16x8xf32>
    %6 = vector.shape_cast %5 : vector<1x4x16x8xf32> to vector<4x16x8xf32>
    %c0_13 = arith.constant 0 : index
    %c0_14 = arith.constant 0 : index
    %c0_15 = arith.constant 0 : index
    %c0_16 = arith.constant 0 : index
    %7 = vector.load %arg6[%c0_13, %c0_14, %c0_15, %c0_16] : memref<1x4x16x8xf32, #tpu.memory_space<vmem>>, vector<1x4x16x8xf32>
    %8 = vector.shape_cast %7 : vector<1x4x16x8xf32> to vector<4x16x8xf32>
    %9 = vector.shape_cast %3 : vector<8x16xf32> to vector<1x8x16xf32>
    %10 = vector.broadcast %9 : vector<1x8x16xf32> to vector<4x8x16xf32>
    "tpu.trace_start"() <{level = 10 : i32, message = "hmc,hcd->hmd"}> : () -> ()
    %cst = arith.constant dense<0.000000e+00> : vector<4x8x8xf32>
    %11 = tpu.matmul %10, %6, %cst {dimension_numbers = #tpu.dot_dimension_numbers<[2], [1], [1], [2], [0, 0, 0, 1, 1, 2], [0], [0]>} : vector<4x8x16xf32>, vector<4x16x8xf32>, vector<4x8x8xf32> -> vector<4x8x8xf32>
    %cst_17 = arith.constant dense<0.000000e+00> : vector<4x8x8xf32>
    %12 = tpu.matmul %10, %8, %cst_17 {dimension_numbers = #tpu.dot_dimension_numbers<[2], [1], [1], [2], [0, 0, 0, 1, 1, 2], [0], [0]>} : vector<4x8x16xf32>, vector<4x16x8xf32>, vector<4x8x8xf32> -> vector<4x8x8xf32>
    "tpu.trace_stop"() : () -> ()
    "tpu.trace_start"() <{level = 10 : i32, message = "hnd,hmd->hnm"}> : () -> ()
    %cst_18 = arith.constant dense<0.000000e+00> : vector<4x8x8xf32>
    %13 = tpu.matmul %1, %11, %cst_18 {dimension_numbers = #tpu.dot_dimension_numbers<[2], [2], [1], [1], [0, 0, 0, 1, 1, 1], [0], [0]>} : vector<4x8x8xf32>, vector<4x8x8xf32>, vector<4x8x8xf32> -> vector<4x8x8xf32>
    "tpu.trace_stop"() : () -> ()
    %cst_19 = arith.constant 0.353553385 : f32
    %14 = vector.broadcast %cst_19 : f32 to vector<4x8x8xf32>
    %15 = arith.mulf %13, %14 : vector<4x8x8xf32>
    %16 = vector.broadcast %4 : vector<1x1x8xf32> to vector<4x8x8xf32>
    %17 = arith.addf %15, %16 : vector<4x8x8xf32>
    %cst_20 = arith.constant dense<0xFF800000> : vector<4x8xf32>
    %18 = vector.multi_reduction <maximumf>, %17, %cst_20 [2] : vector<4x8x8xf32> to vector<4x8xf32>
    %19 = vector.shape_cast %18 : vector<4x8xf32> to vector<4x8x1xf32>
    %20 = vector.broadcast %19 : vector<4x8x1xf32> to vector<4x8x8xf32>
    %21 = arith.subf %17, %20 : vector<4x8x8xf32>
    %22 = math.exp %21 : vector<4x8x8xf32>
    %cst_21 = arith.constant dense<0.000000e+00> : vector<4x8xf32>
    %23 = vector.multi_reduction <add>, %22, %cst_21 [2] : vector<4x8x8xf32> to vector<4x8xf32>
    %24 = vector.shape_cast %23 : vector<4x8xf32> to vector<4x8x1xf32>
    "tpu.trace_start"() <{level = 10 : i32, message = "hnm,hmd->hnd"}> : () -> ()
    %cst_22 = arith.constant dense<0.000000e+00> : vector<4x8x8xf32>
    %25 = tpu.matmul %22, %12, %cst_22 {dimension_numbers = #tpu.dot_dimension_numbers<[2], [1], [1], [2], [0, 0, 0, 1, 1, 2], [0], [0]>} : vector<4x8x8xf32>, vector<4x8x8xf32>, vector<4x8x8xf32> -> vector<4x8x8xf32>
    "tpu.trace_stop"() : () -> ()
    %26 = tpu.reciprocal %24 {approx = true} : vector<4x8x1xf32> -> vector<4x8x1xf32>
    %27 = vector.broadcast %26 : vector<4x8x1xf32> to vector<4x8x8xf32>
    %28 = arith.mulf %25, %27 : vector<4x8x8xf32>
    %c0_23 = arith.constant 0 : index
    %c0_24 = arith.constant 0 : index
    %c0_25 = arith.constant 0 : index
    %c0_26 = arith.constant 0 : index
    %29 = vector.load %arg7[%c0_23, %c0_24, %c0_25, %c0_26] : memref<1x4x8x8xf32, #tpu.memory_space<vmem>>, vector<1x4x8x8xf32>
    %30 = vector.shape_cast %29 : vector<1x4x8x8xf32> to vector<4x8x8xf32>
    %31 = vector.shape_cast %28 : vector<4x8x8xf32> to vector<1x4x8x8xf32>
    tpu.vector_store %arg7[%c0_23, %c0_24, %c0_25, %c0_26], %31 {strides = array<i32>} : memref<1x4x8x8xf32, #tpu.memory_space<vmem>>, vector<1x4x8x8xf32>,
    return
  }
  func.func @transform_0(%arg0: i32, %arg1: memref<2xi32, #tpu.memory_space<smem>>) -> (i32, i32, i32, i32) {
    %c0_i32 = arith.constant 0 : i32
    %c0_i32_0 = arith.constant 0 : i32
    %c0_i32_1 = arith.constant 0 : i32
    %c0_i32_2 = arith.constant 0 : i32
    return %arg0, %c0_i32, %c0_i32_0, %c0_i32_1 : i32, i32, i32, i32
  }
  func.func @transform_1(%arg0: i32, %arg1: memref<2xi32, #tpu.memory_space<smem>>) -> (i32, i32, i32) {
    %c0_i32 = arith.constant 0 : i32
    %c0_i32_0 = arith.constant 0 : i32
    %c0_i32_1 = arith.constant 0 : i32
    return %arg0, %c0_i32, %c0_i32_0 : i32, i32, i32
  }
  func.func @transform_2(%arg0: i32, %arg1: memref<2xi32, #tpu.memory_space<smem>>) -> (i32, i32, i32) {
    %c0_i32 = arith.constant 0 : i32
    %c0_i32_0 = arith.constant 0 : i32
    %c0_i32_1 = arith.constant 0 : i32
    return %arg0, %c0_i32, %c0_i32_0 : i32, i32, i32
  }
  func.func @transform_3(%arg0: i32, %arg1: memref<2xi32, #tpu.memory_space<smem>>) -> (i32, i32, i32, i32) {
    %0 = arith.index_cast %arg0 : i32 to index
    %1 = memref.load %arg1[%0] : memref<2xi32, #tpu.memory_space<smem>>
    %c0_i32 = arith.constant 0 : i32
    %c0_i32_0 = arith.constant 0 : i32
    %c0_i32_1 = arith.constant 0 : i32
    %c0_i32_2 = arith.constant 0 : i32
    return %1, %c0_i32, %c0_i32_0, %c0_i32_1 : i32, i32, i32, i32
  }
  func.func @transform_4(%arg0: i32, %arg1: memref<2xi32, #tpu.memory_space<smem>>) -> (i32, i32, i32, i32) {
    %0 = arith.index_cast %arg0 : i32 to index
    %1 = memref.load %arg1[%0] : memref<2xi32, #tpu.memory_space<smem>>
    %c0_i32 = arith.constant 0 : i32
    %c0_i32_0 = arith.constant 0 : i32
    %c0_i32_1 = arith.constant 0 : i32
    %c0_i32_2 = arith.constant 0 : i32
    return %1, %c0_i32, %c0_i32_0, %c0_i32_1 : i32, i32, i32, i32
  }
  func.func @transform_5(%arg0: i32, %arg1: memref<2xi32, #tpu.memory_space<smem>>) -> (i32, i32, i32, i32) {
    %c0_i32 = arith.constant 0 : i32
    %c0_i32_0 = arith.constant 0 : i32
    %c0_i32_1 = arith.constant 0 : i32
    %c0_i32_2 = arith.constant 0 : i32
    return %arg0, %c0_i32, %c0_i32_0, %c0_i32_1 : i32, i32, i32, i32
  }
}

</mosaic_0001>

<llo_original>
// kernel: tpu_custom_call.1
$region0: #{tpu_custom_call.1}
  #allocation0 [shape = 'u32[]', space=smem, size = 0x4, offset = 0x4, fixed_abs, tag = 'smem constant byte address 0x4 - core index']
  #allocation1 [shape = 'u32[72,128]{1,0:T(1,128)}', space=vmem, size = 0x9000, scoped, tag = 'internal scratch']
  #allocation2 [shape = 's32[1]{0}', space=sflag, size = 0x4, scoped, tag = 'scoped memory for tpu_custom_call.1']
  #allocation3 [shape = 'u8[512]{0}', space=smem, size = 0x200, scoped, tag = 'prefetched SMEM operand 0']
  %s0 = inlined_call_operand.vmem [shape: s32[2], index: 0, kind: input, shape index: {}]
  %s1 = inlined_call_operand.vmem [shape: f32[2,4,8,8], index: 1, kind: input, shape index: {}]
  %s2 = inlined_call_operand.vmem [shape: f32[2,8,16], index: 2, kind: input, shape index: {}]
  %s3 = inlined_call_operand.vmem [shape: f32[2,1,8], index: 3, kind: input, shape index: {}]
  %s4 = inlined_call_operand.vmem [shape: f32[2,4,16,8], index: 4, kind: input, shape index: {}]
  %s5 = inlined_call_operand.vmem [shape: f32[2,4,16,8], index: 5, kind: input, shape index: {}]
  %s6 = inlined_call_operand.hbm [shape: f32[2,4,8,8], index: 6, kind: output, shape index: {}]
  %s7 = sld [smem:[#allocation0]]
  $region53: #{tpu_custom_call.1} parent=0
    _
  %s9 = ssub.s32 1, %s7
  %s10 = scalar_select 0, %s9, %s7
  %s12 = sshll.u32 %s0, 4
  %s13 = int_to_ptr.vmem [resolvable:$true] %s12
  %15 = dma.vmem_to_smem %s13, 16, [#allocation3], [#allocation2]
  %17 = dma.done [#allocation2], 16
  %18 = sfence
  $region1: #{tpu_custom_call.1} parent=0
    #allocation4 [shape = 'u8[32768]{0}', space=vmem, size = 0x8000, scoped, tag = 'output window, operand 0']
    #allocation5 [shape = 's32[2]{0}', space=sflag, size = 0x8, scoped, tag = 'scoped memory for tpu_custom_call.1']
    %19 = vsyncpa [#allocation5], 0
    %s20 = scalar_lea.sflag [#allocation5], 1
    %21 = vsyncpa %s20, 0
    loop: start=0, step=1, limit=4
    $region2: #{tpu_custom_call.1} parent=1 // loop_pre_header
      _
    $region3: #{tpu_custom_call.1} parent=1 // loop_header
      %s23 = sphi 0, %s27
      %p24 = scmp.ge.s32.totalorder %s23, 4
      %s33 = sphi 0, %s35
      %s36 = sphi 0, %s33
      %s37 = sphi 0, %s36
      %s53 = sphi 0, %s37
      %s59 = sphi 0, %s61
      %s62 = sphi 0, %s59
      %s63 = sphi 0, %s62
      %s79 = sphi 0, %s63
      %s85 = sphi 0, %s87
      %s88 = sphi 0, %s85
      %s89 = sphi 0, %s88
      %s105 = sphi 0, %s89
      %s113 = sphi 0, %s115
      %s116 = sphi 0, %s113
      %s117 = sphi 0, %s116
      %s133 = sphi 0, %s117
      %s141 = sphi 0, %s143
      %s144 = sphi 0, %s141
      %s145 = sphi 0, %s144
      %s161 = sphi 0, %s145
      %s167 = sphi 0, %s169
      %s170 = sphi 0, %s167
      %s171 = sphi 0, %s170
      %s187 = sphi 0, %s171
    $region4: #{tpu_custom_call.1} parent=1 // loop_header_branch
      %26 = sbr.rel (%p24) target = $region8
    $region5: #{tpu_custom_call.1} parent=1 // loop_body
      %s28 = ssub.s32 %s23, 1
      %s29 = ssub.s32 %s23, 2
      %s30 = sadd.s32 %s23, 1
      %s31 = ssub.s32 %s23, %s30
      %p32 = scmp.eq.s32.totalorder %s31, 0
      %s34 = sadd.s32 %s33, 1
      %s35 = scalar_select %p32, %s33, %s34
      %p38 = pneg %p32
      %p39 = scmp.eq.s32.totalorder %s23, 1
      %p40 = por %p38, %p39
      %p41 = scmp.ne.s32.totalorder %s33, %s36
      %p42 = scmp.eq.s32.totalorder %s23, 0
      %p43 = por %p41, %p42
      %p44 = scmp.ne.s32.totalorder %s33, %s36
      %p45 = scmp.eq.s32.totalorder %s28, 1
      %p46 = por %p44, %p45
      %p47 = scmp.ne.s32.totalorder %s36, %s37
      %p48 = scmp.eq.s32.totalorder %s28, 0
      %p49 = por %p47, %p48
      %p50 = scmp.ne.s32.totalorder %s36, %s37
      %p51 = scmp.eq.s32.totalorder %s29, 1
      %p52 = por %p50, %p51
      %p54 = scmp.ne.s32.totalorder %s37, %s53
      %p55 = scmp.eq.s32.totalorder %s29, 0
      %p56 = por %p54, %p55
      %s57 = ssub.s32 %s23, %s30
      %p58 = scmp.eq.s32.totalorder %s57, 0
      %s60 = sadd.s32 %s59, 1
      %s61 = scalar_select %p58, %s59, %s60
      %p64 = pneg %p58
      %p65 = scmp.eq.s32.totalorder %s23, 1
      %p66 = por %p64, %p65
      %p67 = scmp.ne.s32.totalorder %s59, %s62
      %p68 = scmp.eq.s32.totalorder %s23, 0
      %p69 = por %p67, %p68
      %p70 = scmp.ne.s32.totalorder %s59, %s62
      %p71 = scmp.eq.s32.totalorder %s28, 1
      %p72 = por %p70, %p71
      %p73 = scmp.ne.s32.totalorder %s62, %s63
      %p74 = scmp.eq.s32.totalorder %s28, 0
      %p75 = por %p73, %p74
      %p76 = scmp.ne.s32.totalorder %s62, %s63
      %p77 = scmp.eq.s32.totalorder %s29, 1
      %p78 = por %p76, %p77
      %p80 = scmp.ne.s32.totalorder %s63, %s79
      %p81 = scmp.eq.s32.totalorder %s29, 0
      %p82 = por %p80, %p81
      %s83 = ssub.s32 %s23, %s30
      %p84 = scmp.eq.s32.totalorder %s83, 0
      %s86 = sadd.s32 %s85, 1
      %s87 = scalar_select %p84, %s85, %s86
      %p90 = pneg %p84
      %p91 = scmp.eq.s32.totalorder %s23, 1
      %p92 = por %p90, %p91
      %p93 = scmp.ne.s32.totalorder %s85, %s88
      %p94 = scmp.eq.s32.totalorder %s23, 0
      %p95 = por %p93, %p94
      %p96 = scmp.ne.s32.totalorder %s85, %s88
      %p97 = scmp.eq.s32.totalorder %s28, 1
      %p98 = por %p96, %p97
      %p99 = scmp.ne.s32.totalorder %s88, %s89
      %p100 = scmp.eq.s32.totalorder %s28, 0
      %p101 = por %p99, %p100
      %p102 = scmp.ne.s32.totalorder %s88, %s89
      %p103 = scmp.eq.s32.totalorder %s29, 1
      %p104 = por %p102, %p103
      %p106 = scmp.ne.s32.totalorder %s89, %s105
      %p107 = scmp.eq.s32.totalorder %s29, 0
      %p108 = por %p106, %p107
      %s109 = sld [smem:[#allocation3 + %s23]]
      %s110 = sld [smem:[#allocation3 + %s30]]
      %s111 = ssub.s32 %s109, %s110
      %p112 = scmp.eq.s32.totalorder %s111, 0
      %s114 = sadd.s32 %s113, 1
      %s115 = scalar_select %p112, %s113, %s114
      %p118 = pneg %p112
      %p119 = scmp.eq.s32.totalorder %s23, 1
      %p120 = por %p118, %p119
      %p121 = scmp.ne.s32.totalorder %s113, %s116
      %p122 = scmp.eq.s32.totalorder %s23, 0
      %p123 = por %p121, %p122
      %p124 = scmp.ne.s32.totalorder %s113, %s116
      %p125 = scmp.eq.s32.totalorder %s28, 1
      %p126 = por %p124, %p125
      %p127 = scmp.ne.s32.totalorder %s116, %s117
      %p128 = scmp.eq.s32.totalorder %s28, 0
      %p129 = por %p127, %p128
      %p130 = scmp.ne.s32.totalorder %s116, %s117
      %p131 = scmp.eq.s32.totalorder %s29, 1
      %p132 = por %p130, %p131
      %p134 = scmp.ne.s32.totalorder %s117, %s133
      %p135 = scmp.eq.s32.totalorder %s29, 0
      %p136 = por %p134, %p135
      %s137 = sld [smem:[#allocation3 + %s23]]
      %s138 = sld [smem:[#allocation3 + %s30]]
      %s139 = ssub.s32 %s137, %s138
      %p140 = scmp.eq.s32.totalorder %s139, 0
      %s142 = sadd.s32 %s141, 1
      %s143 = scalar_select %p140, %s141, %s142
      %p146 = pneg %p140
      %p147 = scmp.eq.s32.totalorder %s23, 1
      %p148 = por %p146, %p147
      %p149 = scmp.ne.s32.totalorder %s141, %s144
      %p150 = scmp.eq.s32.totalorder %s23, 0
      %p151 = por %p149, %p150
      %p152 = scmp.ne.s32.totalorder %s141, %s144
      %p153 = scmp.eq.s32.totalorder %s28, 1
      %p154 = por %p152, %p153
      %p155 = scmp.ne.s32.totalorder %s144, %s145
      %p156 = scmp.eq.s32.totalorder %s28, 0
      %p157 = por %p155, %p156
      %p158 = scmp.ne.s32.totalorder %s144, %s145
      %p159 = scmp.eq.s32.totalorder %s29, 1
      %p160 = por %p158, %p159
      %p162 = scmp.ne.s32.totalorder %s145, %s161
      %p163 = scmp.eq.s32.totalorder %s29, 0
      %p164 = por %p162, %p163
      %s165 = ssub.s32 %s23, %s30
      %p166 = scmp.eq.s32.totalorder %s165, 0
      %s168 = sadd.s32 %s167, 1
      %s169 = scalar_select %p166, %s167, %s168
      %p172 = pneg %p166
      %p173 = scmp.eq.s32.totalorder %s23, 1
      %p174 = por %p172, %p173
      %p175 = scmp.ne.s32.totalorder %s167, %s170
      %p176 = scmp.eq.s32.totalorder %s23, 0
      %p177 = por %p175, %p176
      %p178 = scmp.ne.s32.totalorder %s167, %s170
      %p179 = scmp.eq.s32.totalorder %s28, 1
      %p180 = por %p178, %p179
      %p181 = scmp.ne.s32.totalorder %s170, %s171
      %p182 = scmp.eq.s32.totalorder %s28, 0
      %p183 = por %p181, %p182
      %p184 = scmp.ne.s32.totalorder %s170, %s171
      %p185 = scmp.eq.s32.totalorder %s29, 1
      %p186 = por %p184, %p185
      %p188 = scmp.ne.s32.totalorder %s171, %s187
      %p189 = scmp.eq.s32.totalorder %s29, 0
      %p190 = por %p188, %p189
      %p191 = scmp.le.s32.totalorder 1, %s23
      %p192 = scmp.lt.s32.totalorder %s23, 3
      %p193 = pnand %p191, %p192
      %p194 = pneg %p193
      // Predicated region
      $region9: #{tpu_custom_call.1} parent=5 // pred_check
        _
      $region10: #{tpu_custom_call.1} parent=5 // pred_check_branch
        %196 = sbr.rel (%p193) target = $region12
      $region11: #{tpu_custom_call.1} parent=5 // pred_region
        %s197 = ssub.s32 %s23, 1
      $region12: #{tpu_custom_call.1} parent=5 // pred_fallthru
        _
      %p198 = scmp.lt.s32.totalorder %s23, 2
      // Predicated region
      $region13: #{tpu_custom_call.1} parent=5 // pred_check
        %p199 = pneg %p198
      $region14: #{tpu_custom_call.1} parent=5 // pred_check_branch
        %201 = sbr.rel (%p199) target = $region16
      $region15: #{tpu_custom_call.1} parent=5 // pred_region
        // Predicated region
        $region17: #{tpu_custom_call.1} parent=15 // pred_check
          %p202 = pneg %p43
        $region18: #{tpu_custom_call.1} parent=15 // pred_check_branch
          %204 = sbr.rel (%p202) target = $region20
        $region19: #{tpu_custom_call.1} parent=15 // pred_region
          %p205 = scmp.lt.s32.totalorder %s23, 1
          %s206 = scalar_select %p205, %s23, 1
          %s207 = smul.addr %s206, 4
          %s208 = smul.addr %s207, 8
          %s209 = scalar_lea.vmem %s1, %s208
        $region20: #{tpu_custom_call.1} parent=15 // pred_fallthru
          _
        // Predicated region
        $region21: #{tpu_custom_call.1} parent=15 // pred_check
          %p210 = pneg %p69
        $region22: #{tpu_custom_call.1} parent=15 // pred_check_branch
          %212 = sbr.rel (%p210) target = $region24
        $region23: #{tpu_custom_call.1} parent=15 // pred_region
          %p213 = scmp.lt.s32.totalorder %s23, 1
          %s214 = scalar_select %p213, %s23, 1
          %s215 = smul.addr %s214, 8
          %s216 = scalar_lea.vmem %s2, %s215
        $region24: #{tpu_custom_call.1} parent=15 // pred_fallthru
          _
        // Predicated region
        $region25: #{tpu_custom_call.1} parent=15 // pred_check
          %p217 = pneg %p95
        $region26: #{tpu_custom_call.1} parent=15 // pred_check_branch
          %219 = sbr.rel (%p217) target = $region28
        $region27: #{tpu_custom_call.1} parent=15 // pred_region
          %p220 = scmp.lt.s32.totalorder %s23, 1
          %s221 = scalar_select %p220, %s23, 1
          %s222 = scalar_lea.vmem %s3, %s221
        $region28: #{tpu_custom_call.1} parent=15 // pred_fallthru
          _
        // Predicated region
        $region29: #{tpu_custom_call.1} parent=15 // pred_check
          %p223 = pneg %p123
        $region30: #{tpu_custom_call.1} parent=15 // pred_check_branch
          %225 = sbr.rel (%p223) target = $region32
        $region31: #{tpu_custom_call.1} parent=15 // pred_region
          %s226 = sld [smem:[#allocation3 + %s23]]
          %p227 = scmp.lt.s32.totalorder %s226, 1
          %s228 = scalar_select %p227, %s226, 1
          %s229 = smul.addr %s228, 8
          %s230 = smul.addr %s229, 8
          %s231 = scalar_lea.vmem %s4, %s230
          %s232 = sld [smem:[#allocation3 + %s23]]
        $region32: #{tpu_custom_call.1} parent=15 // pred_fallthru
          _
        // Predicated region
        $region33: #{tpu_custom_call.1} parent=15 // pred_check
          %p233 = pneg %p151
        $region34: #{tpu_custom_call.1} parent=15 // pred_check_branch
          %235 = sbr.rel (%p233) target = $region36
        $region35: #{tpu_custom_call.1} parent=15 // pred_region
          %s236 = sld [smem:[#allocation3 + %s23]]
          %p237 = scmp.lt.s32.totalorder %s236, 1
          %s238 = scalar_select %p237, %s236, 1
          %s239 = smul.addr %s238, 8
          %s240 = smul.addr %s239, 8
          %s241 = scalar_lea.vmem %s5, %s240
          %s242 = sld [smem:[#allocation3 + %s23]]
        $region36: #{tpu_custom_call.1} parent=15 // pred_fallthru
          _
      $region16: #{tpu_custom_call.1} parent=5 // pred_fallthru
        _
      %p243 = scmp.le.s32.totalorder 1, %s23
      %p244 = scmp.lt.s32.totalorder %s23, 3
      %p245 = pnand %p243, %p244
      %p246 = pneg %p245
      // Predicated region
      $region37: #{tpu_custom_call.1} parent=5 // pred_check
        _
      $region38: #{tpu_custom_call.1} parent=5 // pred_check_branch
        %248 = sbr.rel (%p245) target = $region40
      $region39: #{tpu_custom_call.1} parent=5 // pred_region
        %s249 = ssub.s32 %s23, 1
        %p250 = scmp.lt.s32.totalorder %s28, 1
        %s251 = scalar_select %p250, %s28, 1
        %s252 = smul.addr %s251, 4
        %s253 = smul.addr %s252, 8
        %s254 = scalar_lea.vmem %s1, %s253
        %p255 = pneg %p49
        %p256 = pneg %p46
        %p257 = scmp.lt.s32.totalorder %s28, 1
        %s258 = scalar_select %p257, %s28, 1
        %s259 = smul.addr %s258, 8
        %s260 = scalar_lea.vmem %s2, %s259
        %p261 = pneg %p75
        %p262 = pneg %p72
        %p263 = scmp.lt.s32.totalorder %s28, 1
        %s264 = scalar_select %p263, %s28, 1
        %s265 = scalar_lea.vmem %s3, %s264
        %p266 = pneg %p101
        %p267 = pneg %p98
        %s268 = sld [smem:[#allocation3 + %s28]]
        %p269 = scmp.lt.s32.totalorder %s268, 1
        %s270 = scalar_select %p269, %s268, 1
        %s271 = smul.addr %s270, 8
        %s272 = smul.addr %s271, 8
        %s273 = scalar_lea.vmem %s4, %s272
        %p274 = pneg %p129
        %p275 = pneg %p126
        %s276 = sld [smem:[#allocation3 + %s28]]
        %p277 = scmp.lt.s32.totalorder %s276, 1
        %s278 = scalar_select %p277, %s276, 1
        %s279 = smul.addr %s278, 8
        %s280 = smul.addr %s279, 8
        %s281 = scalar_lea.vmem %s5, %s280
        %p282 = pneg %p157
        %p283 = pneg %p154
        %p284 = pneg %p183
        %p285 = pneg %p180
        %s286 = sand.u32 %s170, 1
        %s287 = scalar_lea.sflag [#allocation5], %s286
        %s288 = sand.u32 %s170, 1
        %s289 = smul.addr %s288, 32
        %s290 = scalar_lea.vmem [#allocation4], %s289
        %p291 = scmp.lt.s32.totalorder %s28, 1
        %s292 = scalar_select %p291, %s28, 1
        %s293 = smul.addr %s292, 4
        %s294 = smul.addr %s293, 8
        %s295 = scalar_lea.vmem %s1, %s294
        %p296 = scmp.lt.s32.totalorder %s28, 1
        %s297 = scalar_select %p296, %s28, 1
        %s298 = smul.addr %s297, 8
        %s299 = scalar_lea.vmem %s2, %s298
        %p300 = scmp.lt.s32.totalorder %s28, 1
        %s301 = scalar_select %p300, %s28, 1
        %s302 = scalar_lea.vmem %s3, %s301
        %s303 = sld [smem:[#allocation3 + %s28]]
        %p304 = scmp.lt.s32.totalorder %s303, 1
        %s305 = scalar_select %p304, %s303, 1
        %s306 = smul.addr %s305, 8
        %s307 = smul.addr %s306, 8
        %s308 = scalar_lea.vmem %s4, %s307
        %s309 = sld [smem:[#allocation3 + %s28]]
        %s310 = sld [smem:[#allocation3 + %s28]]
        %p311 = scmp.lt.s32.totalorder %s310, 1
        %s312 = scalar_select %p311, %s310, 1
        %s313 = smul.addr %s312, 8
        %s314 = smul.addr %s313, 8
        %s315 = scalar_lea.vmem %s5, %s314
        %s316 = sld [smem:[#allocation3 + %s28]]
        %v317 = vld [vmem:[%s295] sm:$0xff]
        %v318 = vld [vmem:[%s295 + $0x8] sm:$0xff]
        %v319 = vld [vmem:[%s295 + $0x10] sm:$0xff]
        %v320 = vld [vmem:[%s295 + $0x18] sm:$0xff]
        %v321 = vld [vmem:[%s299] sm:$0xff]
        %v322 = vld [vmem:[%s302] sm:$0x1]
        %v323 = vld [vmem:[%s308] sm:$0xff]
        %v324 = vld [vmem:[%s308 + $0x8] sm:$0xff]
        %v325 = vld [vmem:[%s308 + $0x10] sm:$0xff]
        %v326 = vld [vmem:[%s308 + $0x18] sm:$0xff]
        %v327 = vld [vmem:[%s308 + $0x20] sm:$0xff]
        %v328 = vld [vmem:[%s308 + $0x28] sm:$0xff]
        %v329 = vld [vmem:[%s308 + $0x30] sm:$0xff]
        %v330 = vld [vmem:[%s308 + $0x38] sm:$0xff]
        %v331 = vld [vmem:[%s315] sm:$0xff]
        %v332 = vld [vmem:[%s315 + $0x8] sm:$0xff]
        %v333 = vld [vmem:[%s315 + $0x10] sm:$0xff]
        %v334 = vld [vmem:[%s315 + $0x18] sm:$0xff]
        %v335 = vld [vmem:[%s315 + $0x20] sm:$0xff]
        %v336 = vld [vmem:[%s315 + $0x28] sm:$0xff]
        %v337 = vld [vmem:[%s315 + $0x30] sm:$0xff]
        %v338 = vld [vmem:[%s315 + $0x38] sm:$0xff]
        %vm339 = vcmask 130048
        %v341 = vsel %vm339, %v321, 0
        %343 = vmatpush.msra.mxu0 0.0
        %344 = vmatpush.msra.mxu0 0.0
        %345 = vmatpush.msra.mxu0 0.0
        %346 = vmatpush.msra.mxu0 0.0
        %347 = vmatpush.msra.mxu0 0.0
        %348 = vmatpush.msra.mxu0 0.0
        %349 = vmatpush.msra.mxu0 0.0
        %350 = vmatpush.msra.mxu0 0.0
        %351 = vmatpush.msra.mxu0 0.0
        %352 = vmatpush.msra.mxu0 0.0
        %353 = vmatpush.msra.mxu0 0.0
        %354 = vmatpush.msra.mxu0 0.0
        %355 = vmatpush.msra.mxu0 0.0
        %356 = vmatpush.msra.mxu0 0.0
        %357 = vmatpush.msra.mxu0 %v324
        %358 = vmatpush.msra.mxu0 %v323
        %359 = vmatmul.f32.gmra.mxu0 %v341
        %v360 = vpop.f32.mrf.mxu0
        %v361 = vadd.f32 0.0, %v360
        %362 = vdwg.mxu0
        %363 = vmatpush.msra.mxu0 0.0
        %364 = vmatpush.msra.mxu0 0.0
        %365 = vmatpush.msra.mxu0 0.0
        %366 = vmatpush.msra.mxu0 0.0
        %367 = vmatpush.msra.mxu0 0.0
        %368 = vmatpush.msra.mxu0 0.0
        %369 = vmatpush.msra.mxu0 0.0
        %370 = vmatpush.msra.mxu0 0.0
        %371 = vmatpush.msra.mxu0 0.0
        %372 = vmatpush.msra.mxu0 0.0
        %373 = vmatpush.msra.mxu0 0.0
        %374 = vmatpush.msra.mxu0 0.0
        %375 = vmatpush.msra.mxu0 0.0
        %376 = vmatpush.msra.mxu0 0.0
        %377 = vmatpush.msra.mxu0 %v326
        %378 = vmatpush.msra.mxu0 %v325
        %379 = vmatmul.f32.gmra.mxu0 %v341
        %v380 = vpop.f32.mrf.mxu0
        %v381 = vadd.f32 0.0, %v380
        %382 = vdwg.mxu0
        %383 = vmatpush.msra.mxu0 0.0
        %384 = vmatpush.msra.mxu0 0.0
        %385 = vmatpush.msra.mxu0 0.0
        %386 = vmatpush.msra.mxu0 0.0
        %387 = vmatpush.msra.mxu0 0.0
        %388 = vmatpush.msra.mxu0 0.0
        %389 = vmatpush.msra.mxu0 0.0
        %390 = vmatpush.msra.mxu0 0.0
        %391 = vmatpush.msra.mxu0 0.0
        %392 = vmatpush.msra.mxu0 0.0
        %393 = vmatpush.msra.mxu0 0.0
        %394 = vmatpush.msra.mxu0 0.0
        %395 = vmatpush.msra.mxu0 0.0
        %396 = vmatpush.msra.mxu0 0.0
        %397 = vmatpush.msra.mxu0 %v328
        %398 = vmatpush.msra.mxu0 %v327
        %399 = vmatmul.f32.gmra.mxu0 %v341
        %v400 = vpop.f32.mrf.mxu0
        %v401 = vadd.f32 0.0, %v400
        %402 = vdwg.mxu0
        %403 = vmatpush.msra.mxu0 0.0
        %404 = vmatpush.msra.mxu0 0.0
        %405 = vmatpush.msra.mxu0 0.0
        %406 = vmatpush.msra.mxu0 0.0
        %407 = vmatpush.msra.mxu0 0.0
        %408 = vmatpush.msra.mxu0 0.0
        %409 = vmatpush.msra.mxu0 0.0
        %410 = vmatpush.msra.mxu0 0.0
        %411 = vmatpush.msra.mxu0 0.0
        %412 = vmatpush.msra.mxu0 0.0
        %413 = vmatpush.msra.mxu0 0.0
        %414 = vmatpush.msra.mxu0 0.0
        %415 = vmatpush.msra.mxu0 0.0
        %416 = vmatpush.msra.mxu0 0.0
        %417 = vmatpush.msra.mxu0 %v330
        %418 = vmatpush.msra.mxu0 %v329
        %419 = vmatmul.f32.gmra.mxu0 %v341
        %v420 = vpop.f32.mrf.mxu0
        %v421 = vadd.f32 0.0, %v420
        %422 = vdwg.mxu0
        %423 = vmatpush.msra.mxu0 0.0
        %424 = vmatpush.msra.mxu0 0.0
        %425 = vmatpush.msra.mxu0 0.0
        %426 = vmatpush.msra.mxu0 0.0
        %427 = vmatpush.msra.mxu0 0.0
        %428 = vmatpush.msra.mxu0 0.0
        %429 = vmatpush.msra.mxu0 0.0
        %430 = vmatpush.msra.mxu0 0.0
        %431 = vmatpush.msra.mxu0 0.0
        %432 = vmatpush.msra.mxu0 0.0
        %433 = vmatpush.msra.mxu0 0.0
        %434 = vmatpush.msra.mxu0 0.0
        %435 = vmatpush.msra.mxu0 0.0
        %436 = vmatpush.msra.mxu0 0.0
        %437 = vmatpush.msra.mxu0 %v332
        %438 = vmatpush.msra.mxu0 %v331
        %439 = vmatmul.f32.gmra.mxu0 %v341
        %v440 = vpop.f32.mrf.mxu0
        %v441 = vadd.f32 0.0, %v440
        %442 = vdwg.mxu0
        %443 = vmatpush.msra.mxu0 0.0
        %444 = vmatpush.msra.mxu0 0.0
        %445 = vmatpush.msra.mxu0 0.0
        %446 = vmatpush.msra.mxu0 0.0
        %447 = vmatpush.msra.mxu0 0.0
        %448 = vmatpush.msra.mxu0 0.0
        %449 = vmatpush.msra.mxu0 0.0
        %450 = vmatpush.msra.mxu0 0.0
        %451 = vmatpush.msra.mxu0 0.0
        %452 = vmatpush.msra.mxu0 0.0
        %453 = vmatpush.msra.mxu0 0.0
        %454 = vmatpush.msra.mxu0 0.0
        %455 = vmatpush.msra.mxu0 0.0
        %456 = vmatpush.msra.mxu0 0.0
        %457 = vmatpush.msra.mxu0 %v334
        %458 = vmatpush.msra.mxu0 %v333
        %459 = vmatmul.f32.gmra.mxu0 %v341
        %v460 = vpop.f32.mrf.mxu0
        %v461 = vadd.f32 0.0, %v460
        %462 = vdwg.mxu0
        %463 = vmatpush.msra.mxu0 0.0
        %464 = vmatpush.msra.mxu0 0.0
        %465 = vmatpush.msra.mxu0 0.0
        %466 = vmatpush.msra.mxu0 0.0
        %467 = vmatpush.msra.mxu0 0.0
        %468 = vmatpush.msra.mxu0 0.0
        %469 = vmatpush.msra.mxu0 0.0
        %470 = vmatpush.msra.mxu0 0.0
        %471 = vmatpush.msra.mxu0 0.0
        %472 = vmatpush.msra.mxu0 0.0
        %473 = vmatpush.msra.mxu0 0.0
        %474 = vmatpush.msra.mxu0 0.0
        %475 = vmatpush.msra.mxu0 0.0
        %476 = vmatpush.msra.mxu0 0.0
        %477 = vmatpush.msra.mxu0 %v336
        %478 = vmatpush.msra.mxu0 %v335
        %479 = vmatmul.f32.gmra.mxu0 %v341
        %v480 = vpop.f32.mrf.mxu0
        %v481 = vadd.f32 0.0, %v480
        %482 = vdwg.mxu0
        %483 = vmatpush.msra.mxu0 0.0
        %484 = vmatpush.msra.mxu0 0.0
        %485 = vmatpush.msra.mxu0 0.0
        %486 = vmatpush.msra.mxu0 0.0
        %487 = vmatpush.msra.mxu0 0.0
        %488 = vmatpush.msra.mxu0 0.0
        %489 = vmatpush.msra.mxu0 0.0
        %490 = vmatpush.msra.mxu0 0.0
        %491 = vmatpush.msra.mxu0 0.0
        %492 = vmatpush.msra.mxu0 0.0
        %493 = vmatpush.msra.mxu0 0.0
        %494 = vmatpush.msra.mxu0 0.0
        %495 = vmatpush.msra.mxu0 0.0
        %496 = vmatpush.msra.mxu0 0.0
        %497 = vmatpush.msra.mxu0 %v338
        %498 = vmatpush.msra.mxu0 %v337
        %499 = vmatmul.f32.gmra.mxu0 %v341
        %v500 = vpop.f32.mrf.mxu0
        %v501 = vadd.f32 0.0, %v500
        %502 = vdwg.mxu0
        %vm503 = vcmask 64512
        %v505 = vsel %vm503, %v317, 0
        %v508 = vsel %vm503, %v361, 0
        %510 = vmatpush.xpose.msra.mxu0 0.0
        %511 = vmatpush.xpose.msra.mxu0 0.0
        %512 = vmatpush.xpose.msra.mxu0 0.0
        %513 = vmatpush.xpose.msra.mxu0 0.0
        %514 = vmatpush.xpose.msra.mxu0 0.0
        %515 = vmatpush.xpose.msra.mxu0 0.0
        %516 = vmatpush.xpose.msra.mxu0 0.0
        %517 = vmatpush.xpose.msra.mxu0 0.0
        %518 = vmatpush.xpose.msra.mxu0 0.0
        %519 = vmatpush.xpose.msra.mxu0 0.0
        %520 = vmatpush.xpose.msra.mxu0 0.0
        %521 = vmatpush.xpose.msra.mxu0 0.0
        %522 = vmatpush.xpose.msra.mxu0 0.0
        %523 = vmatpush.xpose.msra.mxu0 0.0
        %524 = vmatpush.xpose.msra.mxu0 0.0
        %525 = vmatpush.xpose.msra.mxu0 %v508
        %526 = vmatmul.f32.gmra.mxu0 %v505
        %v527 = vpop.f32.mrf.mxu0
        %v528 = vadd.f32 0.0, %v527
        %529 = vdwg.mxu0
        %v531 = vsel %vm503, %v318, 0
        %v534 = vsel %vm503, %v381, 0
        %536 = vmatpush.xpose.msra.mxu0 0.0
        %537 = vmatpush.xpose.msra.mxu0 0.0
        %538 = vmatpush.xpose.msra.mxu0 0.0
        %539 = vmatpush.xpose.msra.mxu0 0.0
        %540 = vmatpush.xpose.msra.mxu0 0.0
        %541 = vmatpush.xpose.msra.mxu0 0.0
        %542 = vmatpush.xpose.msra.mxu0 0.0
        %543 = vmatpush.xpose.msra.mxu0 0.0
        %544 = vmatpush.xpose.msra.mxu0 0.0
        %545 = vmatpush.xpose.msra.mxu0 0.0
        %546 = vmatpush.xpose.msra.mxu0 0.0
        %547 = vmatpush.xpose.msra.mxu0 0.0
        %548 = vmatpush.xpose.msra.mxu0 0.0
        %549 = vmatpush.xpose.msra.mxu0 0.0
        %550 = vmatpush.xpose.msra.mxu0 0.0
        %551 = vmatpush.xpose.msra.mxu0 %v534
        %552 = vmatmul.f32.gmra.mxu0 %v531
        %v553 = vpop.f32.mrf.mxu0
        %v554 = vadd.f32 0.0, %v553
        %555 = vdwg.mxu0
        %v557 = vsel %vm503, %v319, 0
        %v560 = vsel %vm503, %v401, 0
        %562 = vmatpush.xpose.msra.mxu0 0.0
        %563 = vmatpush.xpose.msra.mxu0 0.0
        %564 = vmatpush.xpose.msra.mxu0 0.0
        %565 = vmatpush.xpose.msra.mxu0 0.0
        %566 = vmatpush.xpose.msra.mxu0 0.0
        %567 = vmatpush.xpose.msra.mxu0 0.0
        %568 = vmatpush.xpose.msra.mxu0 0.0
        %569 = vmatpush.xpose.msra.mxu0 0.0
        %570 = vmatpush.xpose.msra.mxu0 0.0
        %571 = vmatpush.xpose.msra.mxu0 0.0
        %572 = vmatpush.xpose.msra.mxu0 0.0
        %573 = vmatpush.xpose.msra.mxu0 0.0
        %574 = vmatpush.xpose.msra.mxu0 0.0
        %575 = vmatpush.xpose.msra.mxu0 0.0
        %576 = vmatpush.xpose.msra.mxu0 0.0
        %577 = vmatpush.xpose.msra.mxu0 %v560
        %578 = vmatmul.f32.gmra.mxu0 %v557
        %v579 = vpop.f32.mrf.mxu0
        %v580 = vadd.f32 0.0, %v579
        %581 = vdwg.mxu0
        %v583 = vsel %vm503, %v320, 0
        %v586 = vsel %vm503, %v421, 0
        %588 = vmatpush.xpose.msra.mxu0 0.0
        %589 = vmatpush.xpose.msra.mxu0 0.0
        %590 = vmatpush.xpose.msra.mxu0 0.0
        %591 = vmatpush.xpose.msra.mxu0 0.0
        %592 = vmatpush.xpose.msra.mxu0 0.0
        %593 = vmatpush.xpose.msra.mxu0 0.0
        %594 = vmatpush.xpose.msra.mxu0 0.0
        %595 = vmatpush.xpose.msra.mxu0 0.0
        %596 = vmatpush.xpose.msra.mxu0 0.0
        %597 = vmatpush.xpose.msra.mxu0 0.0
        %598 = vmatpush.xpose.msra.mxu0 0.0
        %599 = vmatpush.xpose.msra.mxu0 0.0
        %600 = vmatpush.xpose.msra.mxu0 0.0
        %601 = vmatpush.xpose.msra.mxu0 0.0
        %602 = vmatpush.xpose.msra.mxu0 0.0
        %603 = vmatpush.xpose.msra.mxu0 %v586
        %604 = vmatmul.f32.gmra.mxu0 %v583
        %v605 = vpop.f32.mrf.mxu0
        %v606 = vadd.f32 0.0, %v605
        %607 = vdwg.mxu0
        %v608 = vmul.f32 %v528, 0.35355338
        %v609 = vmul.f32 %v554, 0.35355338
        %v610 = vmul.f32 %v580, 0.35355338
        %v611 = vmul.f32 %v606, 0.35355338
        %v613 = vperm.slane %v322, 0
        %v615 = vadd.f32 %v608, %v613
        %v616 = vadd.f32 %v609, %v613
        %v617 = vadd.f32 %v610, %v613
        %v618 = vadd.f32 %v611, %v613
        %v619 = vsel %vm503, %v615, -inf
        %620 = vmax.xlane.f32.xlu0 %v619
        %v621 = vpop.xlane.xlu0 %620
        %v622 = vsel %vm503, %v616, -inf
        %623 = vmax.xlane.f32.xlu0 %v622
        %v624 = vpop.xlane.xlu0 %623
        %v625 = vsel %vm503, %v617, -inf
        %626 = vmax.xlane.f32.xlu0 %v625
        %v627 = vpop.xlane.xlu0 %626
        %v628 = vsel %vm503, %v618, -inf
        %629 = vmax.xlane.f32.xlu0 %v628
        %v630 = vpop.xlane.xlu0 %629
        %v631 = vsub.f32 %v615, %v621
        %v632 = vsub.f32 %v616, %v624
        %v633 = vsub.f32 %v617, %v627
        %v634 = vsub.f32 %v618, %v630
        %v635 = vmul.f32 %v631, 1.442695
        %v636 = vpow.pop %v635
        %v637 = vmul.f32 %v632, 1.442695
        %v638 = vpow.pop %v637
        %v639 = vmul.f32 %v633, 1.442695
        %v640 = vpow.pop %v639
        %v641 = vmul.f32 %v634, 1.442695
        %v642 = vpow.pop %v641
        %v643 = vsel %vm503, %v636, 0.0
        %644 = vadd.xlane.f32.xlu0 %v643
        %v645 = vpop.xlane.xlu0 %644
        %v646 = vsel %vm503, %v638, 0.0
        %647 = vadd.xlane.f32.xlu0 %v646
        %v648 = vpop.xlane.xlu0 %647
        %v649 = vsel %vm503, %v640, 0.0
        %650 = vadd.xlane.f32.xlu0 %v649
        %v651 = vpop.xlane.xlu0 %650
        %v652 = vsel %vm503, %v642, 0.0
        %653 = vadd.xlane.f32.xlu0 %v652
        %v654 = vpop.xlane.xlu0 %653
        %v656 = vsel %vm503, %v636, 0
        %658 = vmatpush.msra.mxu0 0.0
        %659 = vmatpush.msra.mxu0 0.0
        %660 = vmatpush.msra.mxu0 0.0
        %661 = vmatpush.msra.mxu0 0.0
        %662 = vmatpush.msra.mxu0 0.0
        %663 = vmatpush.msra.mxu0 0.0
        %664 = vmatpush.msra.mxu0 0.0
        %665 = vmatpush.msra.mxu0 0.0
        %666 = vmatpush.msra.mxu0 0.0
        %667 = vmatpush.msra.mxu0 0.0
        %668 = vmatpush.msra.mxu0 0.0
        %669 = vmatpush.msra.mxu0 0.0
        %670 = vmatpush.msra.mxu0 0.0
        %671 = vmatpush.msra.mxu0 0.0
        %672 = vmatpush.msra.mxu0 0.0
        %673 = vmatpush.msra.mxu0 %v441
        %674 = vmatmul.f32.gmra.mxu0 %v656
        %v675 = vpop.f32.mrf.mxu0
        %v676 = vadd.f32 0.0, %v675
        %677 = vdwg.mxu0
        %v679 = vsel %vm503, %v638, 0
        %681 = vmatpush.msra.mxu0 0.0
        %682 = vmatpush.msra.mxu0 0.0
        %683 = vmatpush.msra.mxu0 0.0
        %684 = vmatpush.msra.mxu0 0.0
        %685 = vmatpush.msra.mxu0 0.0
        %686 = vmatpush.msra.mxu0 0.0
        %687 = vmatpush.msra.mxu0 0.0
        %688 = vmatpush.msra.mxu0 0.0
        %689 = vmatpush.msra.mxu0 0.0
        %690 = vmatpush.msra.mxu0 0.0
        %691 = vmatpush.msra.mxu0 0.0
        %692 = vmatpush.msra.mxu0 0.0
        %693 = vmatpush.msra.mxu0 0.0
        %694 = vmatpush.msra.mxu0 0.0
        %695 = vmatpush.msra.mxu0 0.0
        %696 = vmatpush.msra.mxu0 %v461
        %697 = vmatmul.f32.gmra.mxu0 %v679
        %v698 = vpop.f32.mrf.mxu0
        %v699 = vadd.f32 0.0, %v698
        %700 = vdwg.mxu0
        %v702 = vsel %vm503, %v640, 0
        %704 = vmatpush.msra.mxu0 0.0
        %705 = vmatpush.msra.mxu0 0.0
        %706 = vmatpush.msra.mxu0 0.0
        %707 = vmatpush.msra.mxu0 0.0
        %708 = vmatpush.msra.mxu0 0.0
        %709 = vmatpush.msra.mxu0 0.0
        %710 = vmatpush.msra.mxu0 0.0
        %711 = vmatpush.msra.mxu0 0.0
        %712 = vmatpush.msra.mxu0 0.0
        %713 = vmatpush.msra.mxu0 0.0
        %714 = vmatpush.msra.mxu0 0.0
        %715 = vmatpush.msra.mxu0 0.0
        %716 = vmatpush.msra.mxu0 0.0
        %717 = vmatpush.msra.mxu0 0.0
        %718 = vmatpush.msra.mxu0 0.0
        %719 = vmatpush.msra.mxu0 %v481
        %720 = vmatmul.f32.gmra.mxu0 %v702
        %v721 = vpop.f32.mrf.mxu0
        %v722 = vadd.f32 0.0, %v721
        %723 = vdwg.mxu0
        %v725 = vsel %vm503, %v642, 0
        %727 = vmatpush.msra.mxu0 0.0
        %728 = vmatpush.msra.mxu0 0.0
        %729 = vmatpush.msra.mxu0 0.0
        %730 = vmatpush.msra.mxu0 0.0
        %731 = vmatpush.msra.mxu0 0.0
        %732 = vmatpush.msra.mxu0 0.0
        %733 = vmatpush.msra.mxu0 0.0
        %734 = vmatpush.msra.mxu0 0.0
        %735 = vmatpush.msra.mxu0 0.0
        %736 = vmatpush.msra.mxu0 0.0
        %737 = vmatpush.msra.mxu0 0.0
        %738 = vmatpush.msra.mxu0 0.0
        %739 = vmatpush.msra.mxu0 0.0
        %740 = vmatpush.msra.mxu0 0.0
        %741 = vmatpush.msra.mxu0 0.0
        %742 = vmatpush.msra.mxu0 %v501
        %743 = vmatmul.f32.gmra.mxu0 %v725
        %v744 = vpop.f32.mrf.mxu0
        %v745 = vadd.f32 0.0, %v744
        %746 = vdwg.mxu0
        %v747 = vrcp.pop %v645
        %v748 = vrcp.pop %v648
        %v749 = vrcp.pop %v651
        %v750 = vrcp.pop %v654
        %v751 = vmul.f32 %v676, %v747
        %v752 = vmul.f32 %v699, %v748
        %v753 = vmul.f32 %v722, %v749
        %v754 = vmul.f32 %v745, %v750
        %755 = vst.msk [vmem:[%s290] sm:$0xff] %vm503, %v751
        %756 = vst.msk [vmem:[%s290 + $0x8] sm:$0xff] %vm503, %v752
        %757 = vst.msk [vmem:[%s290 + $0x10] sm:$0xff] %vm503, %v753
        %758 = vst.msk [vmem:[%s290 + $0x18] sm:$0xff] %vm503, %v754
        %s759 = sand.u32 %s170, 1
        %s760 = scalar_lea.sflag [#allocation5], %s759
        %s761 = sand.u32 %s170, 1
        %s762 = smul.addr %s761, 32
        %s763 = scalar_lea.vmem [#allocation4], %s762
        // Predicated region
        $region41: #{tpu_custom_call.1} parent=39 // pred_check
          %p764 = pneg %p180
        $region42: #{tpu_custom_call.1} parent=39 // pred_check_branch
          %766 = sbr.rel (%p764) target = $region44
        $region43: #{tpu_custom_call.1} parent=39 // pred_region
          %768 = vsyncadd %s760, 0
          %s769 = smul.addr %s28, 4
          %s770 = smul.addr %s769, 8
          %s771 = scalar_lea.hbm %s6, %s770
          %s772 = sshll.u32 %s763, 4
          %s773 = int_to_ptr.vmem [resolvable:$true] %s772
          %s774 = sshll.u32 %s771, 4
          %s775 = int_to_ptr.hbm [resolvable:$true] %s774
          %780 = dma.vmem_to_hbm [thread:$0]  %s773, 512, %s775, %s760, 128, 128, 8
        $region44: #{tpu_custom_call.1} parent=39 // pred_fallthru
          _
      $region40: #{tpu_custom_call.1} parent=5 // pred_fallthru
        _
      %p781 = scmp.le.s32.totalorder 2, %s23
      // Predicated region
      $region45: #{tpu_custom_call.1} parent=5 // pred_check
        %p782 = pneg %p781
      $region46: #{tpu_custom_call.1} parent=5 // pred_check_branch
        %784 = sbr.rel (%p782) target = $region48
      $region47: #{tpu_custom_call.1} parent=5 // pred_region
        %s785 = ssub.s32 %s23, 2
        // Predicated region
        $region49: #{tpu_custom_call.1} parent=47 // pred_check
          %p786 = pneg %p186
        $region50: #{tpu_custom_call.1} parent=47 // pred_check_branch
          %788 = sbr.rel (%p786) target = $region52
        $region51: #{tpu_custom_call.1} parent=47 // pred_region
          %s789 = sand.u32 %s171, 1
          %s790 = scalar_lea.sflag [#allocation5], %s789
          %s791 = sand.u32 %s171, 1
          %s792 = smul.addr %s791, 32
          %s793 = scalar_lea.vmem [#allocation4], %s792
          %795 = dma.done %s790, 512
        $region52: #{tpu_custom_call.1} parent=47 // pred_fallthru
          _
      $region48: #{tpu_custom_call.1} parent=5 // pred_fallthru
        _
    $region6: #{tpu_custom_call.1} parent=1 // loop_footer
      %s27 = sadd.s32 1, %s23
    $region7: #{tpu_custom_call.1} parent=1 // loop_footer_branch
      %22 = sbr.rel target = $region3
    $region8: #{tpu_custom_call.1} parent=1 // loop_exit
      _
    %796 = vsyncpa [#allocation5], 1
    %s797 = scalar_lea.sflag [#allocation5], 1
    %798 = vsyncpa %s797, 1

</llo_original>
